<compile_context>
chip_gen: v6e
topology: v6e:2x2x1
jax: 0.10.0
libtpu: 0.0.40
codegen_flags: <defaults>
</compile_context>

<pallas_src>
import functools

import jax
import jax.numpy as jnp
from jax.experimental import pallas as pl
from jax.experimental.pallas import tpu as pltpu

_HIDDEN = 128
_NOUT = 2
_VMEM_LIMIT = 48 * 1024 * 1024      # explicit: > v5e's 16 MiB default, < v7x's 64 MiB/TC
_VMEM_BUDGET = 32 * 1024 * 1024     # target for the double-buffered working set


def _cdiv(a, b):
    return -(-a // b)


def _round_up(x, m):
    return _cdiv(x, m) * m


def _k_layout(F, tk_cap):
    """K-tile size, #K tiles, padded F. Shared by prepare_fmri_params and forward."""
    tk_cap = max(128, (tk_cap // 128) * 128)
    if F <= tk_cap:
        tk = _round_up(F, 128)
        nk = 1
    else:
        tk = tk_cap
        nk = _cdiv(F, tk)
        if nk % 2:              # keep nk even so a 2-way K split is always legal
            nk += 1
    return tk, nk, tk * nk


def prepare_fmri_params(w1, b1, w2, b2, *, dtype=jnp.bfloat16, tk_cap=8192):
    """One-time parameter prep: cast w1 to the streaming dtype (bf16) and pad its
    F axis to the K-tile layout. Doing this at load time avoids an extra full
    HBM pass over w1 on every forward call."""
    F = w1.shape[0]
    assert w1.shape == (F, _HIDDEN) and b1.shape == (_HIDDEN,)
    assert w2.shape == (_HIDDEN, _NOUT) and b2.shape == (_NOUT,)
    _, _, F_pad = _k_layout(F, tk_cap)
    w1p = w1.astype(dtype)
    if F_pad != F:
        w1p = jnp.pad(w1p, ((0, F_pad - F), (0, 0)))  # zero rows keep the sum exact
    return (w1p, b1.astype(jnp.float32), w2.astype(jnp.float32),
            b2.astype(jnp.float32))


def _fmri_mlp_fused_kernel(x_ref, w1_ref, b1_ref, w2_ref, b2_ref, o_ref, acc_ref):
    """Grid (nb, nk): K-tiled fc1 accumulation + fused bias/ReLU/fcout epilogue."""
    k = pl.program_id(1)

    @pl.when(k == 0)
    def _init():
        acc_ref[...] = jnp.zeros_like(acc_ref)

    # fc1 partial matmul for this K tile (bf16 MXU, f32 accumulation).
    acc_ref[...] += jnp.dot(x_ref[...], w1_ref[...],
                            preferred_element_type=jnp.float32)

    @pl.when(k == pl.num_programs(1) - 1)
    def _epilogue():
        h = jnp.maximum(acc_ref[...] + b1_ref[...].astype(jnp.float32), 0.0)
        # Dropout(0.9): identity in eval/inference mode.
        out = jnp.dot(h, w2_ref[...].astype(jnp.float32),
                      preferred_element_type=jnp.float32)
        o_ref[...] = (out + b2_ref[...].astype(jnp.float32)).astype(o_ref.dtype)


def _fmri_fc1_partial_kernel(x_ref, w1_ref, h_ref, acc_ref):
    """Grid (ns, nb, nk_s): per-split fc1 pre-activation partial sums.
    The leading 'parallel' split axis lets both v7x TensorCores each stream
    half of w1 when there is only one batch tile."""
    k = pl.program_id(2)

    @pl.when(k == 0)
    def _init():
        acc_ref[...] = jnp.zeros_like(acc_ref)

    acc_ref[...] += jnp.dot(x_ref[...], w1_ref[...],
                            preferred_element_type=jnp.float32)

    @pl.when(k == pl.num_programs(2) - 1)
    def _done():
        h_ref[...] = acc_ref[...]


@functools.partial(jax.jit, static_argnames=("k_splits", "tk_cap", "tm_cap"))
def fmri_net_forward(x, w1, b1, w2, b2, *, k_splits=None, tk_cap=8192, tm_cap=512):
    """x: [B, ...]; w1: [F or F_pad, 128] (ideally from prepare_fmri_params);
    returns [B, 2] float32."""
    B = x.shape[0]
    x2d = x.reshape(B, -1)
    F = x2d.shape[1]
    assert w1.shape[1] == _HIDDEN and b1.shape == (_HIDDEN,)
    assert w2.shape == (_HIDDEN, _NOUT) and b2.shape == (_NOUT,)

    cdtype = w1.dtype                       # streaming/compute dtype (bf16 preferred)
    itemsize = jnp.dtype(cdtype).itemsize

    # ---- K tiling (must match prepare_fmri_params for the same tk_cap) ----
    tk, nk, F_pad = _k_layout(F, tk_cap)
    if w1.shape[0] == F_pad:
        w1_p = w1
    elif w1.shape[0] == F:
        # Fallback: per-call pad costs an extra HBM pass; prefer prepare_fmri_params.
        w1_p = jnp.pad(w1, ((0, F_pad - F), (0, 0)))
    else:
        raise ValueError(f"w1 F-dim {w1.shape[0]} matches neither F={F} nor F_pad={F_pad}")

    # ---- batch tiling: balanced tiles, single tile for small B ----
    g = 16 if itemsize <= 2 else 8          # sublane granularity (bf16 packs 16 rows)
    Bg = _round_up(B, g)
    if Bg <= tm_cap:
        tm = Bg                             # one batch tile -> w1 streamed once
    else:
        nb0 = _cdiv(Bg, tm_cap)
        tm = _round_up(_cdiv(Bg, nb0), g)   # balanced (no nearly-empty trailing tile)
    # keep the double-buffered working set under budget (shrink tm if needed)
    while tm > g and (2 * (tm * tk + tk * _HIDDEN) * itemsize
                      + tm * _HIDDEN * 4) > _VMEM_BUDGET:
        tm = max(g, _round_up(tm // 2, g))
    B_pad = _round_up(B, tm)
    nb = B_pad // tm

    # ---- K split across cores for small-batch runs ----
    if k_splits is None:
        ns = 2 if (nb == 1 and nk >= 2) else 1
    else:
        ns = max(1, int(k_splits))
    if nk % ns != 0:
        ns = 1

    # ---- pad / cast activations (zeros keep the K accumulation exact) ----
    x_p = x2d.astype(cdtype)
    if (B_pad, F_pad) != (B, F):
        x_p = jnp.pad(x_p, ((0, B_pad - B), (0, F_pad - F)))

    x_bytes = B_pad * F_pad * itemsize
    w1_bytes = nb * F_pad * _HIDDEN * itemsize
    fc1_flops = 2 * B_pad * F_pad * _HIDDEN

    if ns == 1:
        b1_2d = b1.reshape(1, _HIDDEN)
        b2_2d = b2.reshape(1, _NOUT)
        out = pl.pallas_call(
            _fmri_mlp_fused_kernel,
            out_shape=jax.ShapeDtypeStruct((B_pad, _NOUT), jnp.float32),
            grid_spec=pltpu.PrefetchScalarGridSpec(
                num_scalar_prefetch=0,
                grid=(nb, nk),
                in_specs=[
                    pl.BlockSpec((tm, tk), lambda i, k: (i, k)),          # x (streamed)
                    pl.BlockSpec((tk, _HIDDEN), lambda i, k: (k, 0)),     # w1 (streamed)
                    pl.BlockSpec((1, _HIDDEN), lambda i, k: (0, 0)),      # b1 (resident)
                    pl.BlockSpec((_HIDDEN, _NOUT), lambda i, k: (0, 0)),  # w2 (resident)
                    pl.BlockSpec((1, _NOUT), lambda i, k: (0, 0)),        # b2 (resident)
                ],
                out_specs=pl.BlockSpec((tm, _NOUT), lambda i, k: (i, 0)),
                scratch_shapes=[pltpu.VMEM((tm, _HIDDEN), jnp.float32)],  # fc1 accumulator
            ),
            compiler_params=pltpu.CompilerParams(
                dimension_semantics=("parallel", "arbitrary"),
                vmem_limit_bytes=_VMEM_LIMIT,
            ),
            cost_estimate=pl.CostEstimate(
                flops=fc1_flops + 2 * B_pad * _HIDDEN * _NOUT,
                transcendentals=0,
                bytes_accessed=w1_bytes + x_bytes + B_pad * _NOUT * 4,
            ),
        )(x_p, w1_p, b1_2d, w2, b2_2d)
        return out[:B]

    # ---- split path: partial fc1 per K-split, tiny XLA epilogue ----
    nk_s = nk // ns
    h_part = pl.pallas_call(
        _fmri_fc1_partial_kernel,
        out_shape=jax.ShapeDtypeStruct((ns, B_pad, _HIDDEN), jnp.float32),
        grid_spec=pltpu.PrefetchScalarGridSpec(
            num_scalar_prefetch=0,
            grid=(ns, nb, nk_s),
            in_specs=[
                pl.BlockSpec((tm, tk),
                             lambda s, i, k, nk_s=nk_s: (i, s * nk_s + k)),
                pl.BlockSpec((tk, _HIDDEN),
                             lambda s, i, k, nk_s=nk_s: (s * nk_s + k, 0)),
            ],
            out_specs=pl.BlockSpec((None, tm, _HIDDEN), lambda s, i, k: (s, i, 0)),
            scratch_shapes=[pltpu.VMEM((tm, _HIDDEN), jnp.float32)],
        ),
        compiler_params=pltpu.CompilerParams(
            dimension_semantics=("parallel", "parallel", "arbitrary"),
            vmem_limit_bytes=_VMEM_LIMIT,
        ),
        cost_estimate=pl.CostEstimate(
            flops=fc1_flops,
            transcendentals=0,
            bytes_accessed=w1_bytes + x_bytes + ns * B_pad * _HIDDEN * 4,
        ),
    )(x_p, w1_p)

    h = jnp.maximum(h_part.sum(axis=0) + b1.astype(jnp.float32), 0.0)
    out = h @ w2.astype(jnp.float32) + b2.astype(jnp.float32)
    return out[:B]


def _ref_forward(x, w1, b1, w2, b2):
    B = x.shape[0]
    x2d = x.reshape(B, -1).astype(jnp.float32)
    h = jnp.maximum(x2d @ w1.astype(jnp.float32) + b1.astype(jnp.float32), 0.0)
    return h @ w2.astype(jnp.float32) + b2.astype(jnp.float32)


if __name__ == "__main__":
    key = jax.random.PRNGKey(0)
    kx, k1, k2, k3, k4, kx2 = jax.random.split(key, 6)

    C, H, W = 4, 16, 16
    insize = C * H * W  # 1024

    # Deterministic parameters (shapes from fmriNet.__init__, stored transposed).
    w1 = jax.random.normal(k1, (insize, 128), dtype=jnp.float32) * 0.05
    b1 = jax.random.normal(k2, (128,), dtype=jnp.float32) * 0.05
    w2 = jax.random.normal(k3, (128, 2), dtype=jnp.float32) * 0.05
    b2 = jax.random.normal(k4, (2,), dtype=jnp.float32) * 0.05

    # One-time param prep: bf16 weight stream + K-tile padding (no per-call cast).
    w1p, b1p, w2p, b2p = prepare_fmri_params(w1, b1, w2, b2)

    def run_and_check(x, **kw):
        out = jax.block_until_ready(fmri_net_forward(x, w1p, b1p, w2p, b2p, **kw))
        assert out.shape == (x.shape[0], 2)
        # Matched-precision reference (bf16-rounded operands, f32 math).
        ref_bf = _ref_forward(x.astype(jnp.bfloat16), w1p, b1, w2, b2)
        assert jnp.allclose(out, ref_bf, atol=2e-3, rtol=2e-3)
        # Loose check against the pure-f32 PyTorch-equivalent forward.
        ref_f32 = _ref_forward(x, w1, b1, w2, b2)
        assert jnp.allclose(out, ref_f32, atol=1e-1, rtol=1e-1)
        return out

    # 1) Default config: single K tile, single batch tile, fused epilogue.
    x = jax.random.normal(kx, (2, C, H, W), dtype=jnp.float32)
    run_and_check(x)

    # 2) Small-batch K-split path (small tk_cap to exercise it at toy size): grid (2,1,2).
    run_and_check(x, tk_cap=256)

    # 3) Multi-batch-tile fused path with K accumulation: grid (2, 4).
    x3 = jax.random.normal(kx2, (18, C, H, W), dtype=jnp.float32)
    run_and_check(x3, tk_cap=256, tm_cap=16, k_splits=1)

    print("KERNEL_OK")
</pallas_src>

<mosaic_0001>
module attributes {stable_mosaic.version = 11 : i64} {
  func.func @_fmri_mlp_fused_kernel(%arg0: i32, %arg1: i32, %arg2: memref<16x1024xbf16, #tpu.memory_space<vmem>>, %arg3: memref<1024x128xbf16, #tpu.memory_space<vmem>>, %arg4: memref<1x128xf32, #tpu.memory_space<vmem>>, %arg5: memref<128x2xf32, #tpu.memory_space<vmem>>, %arg6: memref<1x2xf32, #tpu.memory_space<vmem>>, %arg7: memref<16x2xf32, #tpu.memory_space<vmem>>, %arg8: memref<16x128xf32, #tpu.memory_space<vmem>>) attributes {dimension_semantics = [#tpu.dimension_semantics<parallel>, #tpu.dimension_semantics<arbitrary>], iteration_bounds = array<i64: 1, 1>, scalar_prefetch = 0 : i64, scratch_operands = 1 : i64, tpu.core_type = #tpu.core_type<tc>, window_params = [{transform_indices = @transform_0, window_bounds = array<i64: 16, 1024>}, {transform_indices = @transform_1, window_bounds = array<i64: 1024, 128>}, {pipeline_mode = #tpu.pipeline_mode<synchronous>, transform_indices = @transform_2, window_bounds = array<i64: 1, 128>}, {pipeline_mode = #tpu.pipeline_mode<synchronous>, transform_indices = @transform_3, window_bounds = array<i64: 128, 2>}, {pipeline_mode = #tpu.pipeline_mode<synchronous>, transform_indices = @transform_4, window_bounds = array<i64: 1, 2>}, {transform_indices = @transform_5, window_bounds = array<i64: 16, 2>}]} {
    %c0_i32 = arith.constant 0 : i32
    %0 = arith.cmpi eq, %arg1, %c0_i32 : i32
    %1 = arith.extui %0 : i1 to i32
    %c0_i32_0 = arith.constant 0 : i32
    %2 = arith.cmpi ne, %1, %c0_i32_0 : i32
    scf.if %2 {
      %cst_10 = arith.constant 0.000000e+00 : f32
      %12 = vector.broadcast %cst_10 : f32 to vector<16x128xf32>
      %c0_11 = arith.constant 0 : index
      %c0_12 = arith.constant 0 : index
      %13 = vector.load %arg8[%c0_11, %c0_12] : memref<16x128xf32, #tpu.memory_space<vmem>>, vector<16x128xf32>
      tpu.vector_store %arg8[%c0_11, %c0_12], %12 {strides = array<i32>} : memref<16x128xf32, #tpu.memory_space<vmem>>, vector<16x128xf32>,
    } else {
    }
    %c0 = arith.constant 0 : index
    %c0_1 = arith.constant 0 : index
    %3 = vector.load %arg8[%c0, %c0_1] : memref<16x128xf32, #tpu.memory_space<vmem>>, vector<16x128xf32>
    %c0_2 = arith.constant 0 : index
    %c0_3 = arith.constant 0 : index
    %4 = vector.load %arg2[%c0_2, %c0_3] : memref<16x1024xbf16, #tpu.memory_space<vmem>>, vector<16x1024xbf16>
    %c0_4 = arith.constant 0 : index
    %c0_5 = arith.constant 0 : index
    %5 = vector.load %arg3[%c0_4, %c0_5] : memref<1024x128xbf16, #tpu.memory_space<vmem>>, vector<1024x128xbf16>
    %cst = arith.constant dense<0.000000e+00> : vector<16x128xf32>
    %6 = tpu.matmul %4, %5, %cst {dimension_numbers = #tpu.dot_dimension_numbers<[1], [0], [0], [1], [0, 0, 1, 1], [], []>} : vector<16x1024xbf16>, vector<1024x128xbf16>, vector<16x128xf32> -> vector<16x128xf32>
    %7 = arith.addf %3, %6 : vector<16x128xf32>
    %c0_6 = arith.constant 0 : index
    %c0_7 = arith.constant 0 : index
    %8 = vector.load %arg8[%c0_6, %c0_7] : memref<16x128xf32, #tpu.memory_space<vmem>>, vector<16x128xf32>
    tpu.vector_store %arg8[%c0_6, %c0_7], %7 {strides = array<i32>} : memref<16x128xf32, #tpu.memory_space<vmem>>, vector<16x128xf32>,
    %c0_i32_8 = arith.constant 0 : i32
    %9 = arith.cmpi eq, %arg1, %c0_i32_8 : i32
    %10 = arith.extui %9 : i1 to i32
    %c0_i32_9 = arith.constant 0 : i32
    %11 = arith.cmpi ne, %10, %c0_i32_9 : i32
    scf.if %11 {
      %c0_10 = arith.constant 0 : index
      %c0_11 = arith.constant 0 : index
      %12 = vector.load %arg8[%c0_10, %c0_11] : memref<16x128xf32, #tpu.memory_space<vmem>>, vector<16x128xf32>
      %c0_12 = arith.constant 0 : index
      %c0_13 = arith.constant 0 : index
      %13 = vector.load %arg4[%c0_12, %c0_13] : memref<1x128xf32, #tpu.memory_space<vmem>>, vector<1x128xf32>
      %14 = vector.broadcast %13 : vector<1x128xf32> to vector<16x128xf32>
      %15 = arith.addf %12, %14 : vector<16x128xf32>
      %cst_14 = arith.constant 0.000000e+00 : f32
      %16 = vector.broadcast %cst_14 : f32 to vector<16x128xf32>
      %17 = arith.maximumf %15, %16 : vector<16x128xf32>
      %c0_15 = arith.constant 0 : index
      %c0_16 = arith.constant 0 : index
      %18 = vector.load %arg5[%c0_15, %c0_16] : memref<128x2xf32, #tpu.memory_space<vmem>>, vector<128x2xf32>
      %cst_17 = arith.constant dense<0.000000e+00> : vector<16x2xf32>
      %19 = tpu.matmul %17, %18, %cst_17 {dimension_numbers = #tpu.dot_dimension_numbers<[1], [0], [0], [1], [0, 0, 1, 1], [], []>} : vector<16x128xf32>, vector<128x2xf32>, vector<16x2xf32> -> vector<16x2xf32>
      %c0_18 = arith.constant 0 : index
      %c0_19 = arith.constant 0 : index
      %20 = vector.load %arg6[%c0_18, %c0_19] : memref<1x2xf32, #tpu.memory_space<vmem>>, vector<1x2xf32>
      %21 = vector.broadcast %20 : vector<1x2xf32> to vector<16x2xf32>
      %22 = arith.addf %19, %21 : vector<16x2xf32>
      %c0_20 = arith.constant 0 : index
      %c0_21 = arith.constant 0 : index
      %23 = vector.load %arg7[%c0_20, %c0_21] : memref<16x2xf32, #tpu.memory_space<vmem>>, vector<16x2xf32>
      tpu.vector_store %arg7[%c0_20, %c0_21], %22 {strides = array<i32>} : memref<16x2xf32, #tpu.memory_space<vmem>>, vector<16x2xf32>,
    } else {
    }
    return
  }
  func.func @transform_0(%arg0: i32, %arg1: i32) -> (i32, i32) {
    %c0_i32 = arith.constant 0 : i32
    return %arg0, %arg1 : i32, i32
  }
  func.func @transform_1(%arg0: i32, %arg1: i32) -> (i32, i32) {
    %c0_i32 = arith.constant 0 : i32
    %c0_i32_0 = arith.constant 0 : i32
    return %arg1, %c0_i32 : i32, i32
  }
  func.func @transform_2(%arg0: i32, %arg1: i32) -> (i32, i32) {
    %c0_i32 = arith.constant 0 : i32
    %c0_i32_0 = arith.constant 0 : i32
    %c0_i32_1 = arith.constant 0 : i32
    return %c0_i32, %c0_i32_0 : i32, i32
  }
  func.func @transform_3(%arg0: i32, %arg1: i32) -> (i32, i32) {
    %c0_i32 = arith.constant 0 : i32
    %c0_i32_0 = arith.constant 0 : i32
    %c0_i32_1 = arith.constant 0 : i32
    return %c0_i32, %c0_i32_0 : i32, i32
  }
  func.func @transform_4(%arg0: i32, %arg1: i32) -> (i32, i32) {
    %c0_i32 = arith.constant 0 : i32
    %c0_i32_0 = arith.constant 0 : i32
    %c0_i32_1 = arith.constant 0 : i32
    return %c0_i32, %c0_i32_0 : i32, i32
  }
  func.func @transform_5(%arg0: i32, %arg1: i32) -> (i32, i32) {
    %c0_i32 = arith.constant 0 : i32
    %c0_i32_0 = arith.constant 0 : i32
    return %arg0, %c0_i32 : i32, i32
  }
}

</mosaic_0001>

<llo_original>
// kernel: fmri_net_forward.1
$region0: #{fmri_net_forward.1}
  #allocation0 [shape = 'u32[]', space=smem, size = 0x4, offset = 0x4, fixed_abs, tag = 'smem constant byte address 0x4 - core index']
  #allocation1 [shape = 'u32[144,128]{1,0:T(1,128)}', space=vmem, size = 0x12000, scoped, tag = 'internal scratch']
  #allocation2 [shape = 'f32[16,128]{1,0:T(8,128)}', space=vmem, size = 0x2000, scoped, tag = 'scratch operand']
  %s0 = inlined_call_operand.vmem [shape: bf16[16,1024], index: 0, kind: input, shape index: {}]
  %s1 = inlined_call_operand.hbm [shape: bf16[1024,128], index: 1, kind: input, shape index: {}]
  %s2 = inlined_call_operand.vmem [shape: f32[1,128], index: 2, kind: input, shape index: {}]
  %s3 = inlined_call_operand.vmem [shape: f32[128,2], index: 3, kind: input, shape index: {}]
  %s4 = inlined_call_operand.vmem [shape: f32[1,2], index: 4, kind: input, shape index: {}]
  %s5 = inlined_call_operand.vmem [shape: f32[16,2], index: 5, kind: output, shape index: {}]
  %s6 = sld [smem:[#allocation0]]
  $region42: #{fmri_net_forward.1} parent=0
    _
  %s8 = ssub.s32 1, %s6
  %s9 = scalar_select 0, %s8, %s6
  $region1: #{fmri_net_forward.1} parent=0
    #allocation3 [shape = 'u8[262144]{0}', space=vmem, size = 0x40000, scoped, tag = 'input window, operand 1, single buffered']
    #allocation4 [shape = 's32[1]{0}', space=sflag, size = 0x4, scoped, tag = 'scoped memory for fmri_net_forward.1']
    %10 = vsyncpa [#allocation4], 0
    // Predicated region
    $region2: #{fmri_net_forward.1} parent=1 // pred_check
      _
    $region3: #{fmri_net_forward.1} parent=1 // pred_check_branch
      %12 = sbr.rel (0) target = $region5
    $region4: #{fmri_net_forward.1} parent=1 // pred_region
      _
    $region5: #{fmri_net_forward.1} parent=1 // pred_fallthru
      _
    // Predicated region
    $region6: #{fmri_net_forward.1} parent=1 // pred_check
      _
    $region7: #{fmri_net_forward.1} parent=1 // pred_check_branch
      %14 = sbr.rel (0) target = $region9
    $region8: #{fmri_net_forward.1} parent=1 // pred_region
      %s16 = ssub.s32 8192, 8192
      %17 = vsyncadd [#allocation4], %s16
      %s18 = sshll.u32 [#allocation3], 4
      %s19 = int_to_ptr.vmem [resolvable:$true] %s18
      %24 = dma.hbm_to_vmem [thread:$0]  %s1, 8192, %s19, [#allocation4], 64, 64, 4
    $region9: #{fmri_net_forward.1} parent=1 // pred_fallthru
      _
    // Predicated region
    $region10: #{fmri_net_forward.1} parent=1 // pred_check
      _
    $region11: #{fmri_net_forward.1} parent=1 // pred_check_branch
      %26 = sbr.rel (0) target = $region13
    $region12: #{fmri_net_forward.1} parent=1 // pred_region
      _
    $region13: #{fmri_net_forward.1} parent=1 // pred_fallthru
      _
    // Predicated region
    $region14: #{fmri_net_forward.1} parent=1 // pred_check
      _
    $region15: #{fmri_net_forward.1} parent=1 // pred_check_branch
      %28 = sbr.rel (0) target = $region17
    $region16: #{fmri_net_forward.1} parent=1 // pred_region
      _
    $region17: #{fmri_net_forward.1} parent=1 // pred_fallthru
      _
    // Predicated region
    $region18: #{fmri_net_forward.1} parent=1 // pred_check
      _
    $region19: #{fmri_net_forward.1} parent=1 // pred_check_branch
      %30 = sbr.rel (0) target = $region21
    $region20: #{fmri_net_forward.1} parent=1 // pred_region
      _
    $region21: #{fmri_net_forward.1} parent=1 // pred_fallthru
      _
    // Predicated region
    $region22: #{fmri_net_forward.1} parent=1 // pred_check
      _
    $region23: #{fmri_net_forward.1} parent=1 // pred_check_branch
      %32 = sbr.rel (0) target = $region25
    $region24: #{fmri_net_forward.1} parent=1 // pred_region
      %33 = dma.done [#allocation4], 8192
    $region25: #{fmri_net_forward.1} parent=1 // pred_fallthru
      _
    %p35 = scmp.eq.s32.totalorder 0, 0
    // Predicated region
    $region26: #{fmri_net_forward.1} parent=1 // pred_check
      %p36 = pneg %p35
    $region27: #{fmri_net_forward.1} parent=1 // pred_check_branch
      %38 = sbr.rel (%p36) target = $region29
    $region28: #{fmri_net_forward.1} parent=1 // pred_region
      %39 = vst [vmem:[#allocation2] sm:$0xff] 0.0
      %40 = vst [vmem:[#allocation2 + $0x8] sm:$0xff] 0.0
    $region29: #{fmri_net_forward.1} parent=1 // pred_fallthru
      _
    %v41 = vld [vmem:[#allocation2] sm:$0xff]
    %v42 = vld [vmem:[#allocation2 + $0x8] sm:$0xff]
    %v43 = vld [vmem:[%s0] sm:$0xff]
    %v44 = vld [vmem:[%s0 + $0x8] sm:$0xff]
    %v45 = vld [vmem:[%s0 + $0x10] sm:$0xff]
    %v46 = vld [vmem:[%s0 + $0x18] sm:$0xff]
    %v47 = vld [vmem:[%s0 + $0x20] sm:$0xff]
    %v48 = vld [vmem:[%s0 + $0x28] sm:$0xff]
    %v49 = vld [vmem:[%s0 + $0x30] sm:$0xff]
    %v50 = vld [vmem:[%s0 + $0x38] sm:$0xff]
    %v51 = vld [vmem:[#allocation3] sm:$0xf]
    %v52 = vld [vmem:[#allocation3 + $0x4] sm:$0xf]
    %v53 = vld [vmem:[#allocation3 + $0x8] sm:$0xf]
    %v54 = vld [vmem:[#allocation3 + $0xc] sm:$0xf]
    %v55 = vld [vmem:[#allocation3 + $0x10] sm:$0xf]
    %v56 = vld [vmem:[#allocation3 + $0x14] sm:$0xf]
    %v57 = vld [vmem:[#allocation3 + $0x18] sm:$0xf]
    %v58 = vld [vmem:[#allocation3 + $0x1c] sm:$0xf]
    %v59 = vld [vmem:[#allocation3 + $0x20] sm:$0xf]
    %v60 = vld [vmem:[#allocation3 + $0x24] sm:$0xf]
    %v61 = vld [vmem:[#allocation3 + $0x28] sm:$0xf]
    %v62 = vld [vmem:[#allocation3 + $0x2c] sm:$0xf]
    %v63 = vld [vmem:[#allocation3 + $0x30] sm:$0xf]
    %v64 = vld [vmem:[#allocation3 + $0x34] sm:$0xf]
    %v65 = vld [vmem:[#allocation3 + $0x38] sm:$0xf]
    %v66 = vld [vmem:[#allocation3 + $0x3c] sm:$0xf]
    %v67 = vld [vmem:[#allocation3 + $0x40] sm:$0xf]
    %v68 = vld [vmem:[#allocation3 + $0x44] sm:$0xf]
    %v69 = vld [vmem:[#allocation3 + $0x48] sm:$0xf]
    %v70 = vld [vmem:[#allocation3 + $0x4c] sm:$0xf]
    %v71 = vld [vmem:[#allocation3 + $0x50] sm:$0xf]
    %v72 = vld [vmem:[#allocation3 + $0x54] sm:$0xf]
    %v73 = vld [vmem:[#allocation3 + $0x58] sm:$0xf]
    %v74 = vld [vmem:[#allocation3 + $0x5c] sm:$0xf]
    %v75 = vld [vmem:[#allocation3 + $0x60] sm:$0xf]
    %v76 = vld [vmem:[#allocation3 + $0x64] sm:$0xf]
    %v77 = vld [vmem:[#allocation3 + $0x68] sm:$0xf]
    %v78 = vld [vmem:[#allocation3 + $0x6c] sm:$0xf]
    %v79 = vld [vmem:[#allocation3 + $0x70] sm:$0xf]
    %v80 = vld [vmem:[#allocation3 + $0x74] sm:$0xf]
    %v81 = vld [vmem:[#allocation3 + $0x78] sm:$0xf]
    %v82 = vld [vmem:[#allocation3 + $0x7c] sm:$0xf]
    %v83 = vld [vmem:[#allocation3 + $0x80] sm:$0xf]
    %v84 = vld [vmem:[#allocation3 + $0x84] sm:$0xf]
    %v85 = vld [vmem:[#allocation3 + $0x88] sm:$0xf]
    %v86 = vld [vmem:[#allocation3 + $0x8c] sm:$0xf]
    %v87 = vld [vmem:[#allocation3 + $0x90] sm:$0xf]
    %v88 = vld [vmem:[#allocation3 + $0x94] sm:$0xf]
    %v89 = vld [vmem:[#allocation3 + $0x98] sm:$0xf]
    %v90 = vld [vmem:[#allocation3 + $0x9c] sm:$0xf]
    %v91 = vld [vmem:[#allocation3 + $0xa0] sm:$0xf]
    %v92 = vld [vmem:[#allocation3 + $0xa4] sm:$0xf]
    %v93 = vld [vmem:[#allocation3 + $0xa8] sm:$0xf]
    %v94 = vld [vmem:[#allocation3 + $0xac] sm:$0xf]
    %v95 = vld [vmem:[#allocation3 + $0xb0] sm:$0xf]
    %v96 = vld [vmem:[#allocation3 + $0xb4] sm:$0xf]
    %v97 = vld [vmem:[#allocation3 + $0xb8] sm:$0xf]
    %v98 = vld [vmem:[#allocation3 + $0xbc] sm:$0xf]
    %v99 = vld [vmem:[#allocation3 + $0xc0] sm:$0xf]
    %v100 = vld [vmem:[#allocation3 + $0xc4] sm:$0xf]
    %v101 = vld [vmem:[#allocation3 + $0xc8] sm:$0xf]
    %v102 = vld [vmem:[#allocation3 + $0xcc] sm:$0xf]
    %v103 = vld [vmem:[#allocation3 + $0xd0] sm:$0xf]
    %v104 = vld [vmem:[#allocation3 + $0xd4] sm:$0xf]
    %v105 = vld [vmem:[#allocation3 + $0xd8] sm:$0xf]
    %v106 = vld [vmem:[#allocation3 + $0xdc] sm:$0xf]
    %v107 = vld [vmem:[#allocation3 + $0xe0] sm:$0xf]
    %v108 = vld [vmem:[#allocation3 + $0xe4] sm:$0xf]
    %v109 = vld [vmem:[#allocation3 + $0xe8] sm:$0xf]
    %v110 = vld [vmem:[#allocation3 + $0xec] sm:$0xf]
    %v111 = vld [vmem:[#allocation3 + $0xf0] sm:$0xf]
    %v112 = vld [vmem:[#allocation3 + $0xf4] sm:$0xf]
    %v113 = vld [vmem:[#allocation3 + $0xf8] sm:$0xf]
    %v114 = vld [vmem:[#allocation3 + $0xfc] sm:$0xf]
    %v115 = vld [vmem:[#allocation3 + $0x100] sm:$0xf]
    %v116 = vld [vmem:[#allocation3 + $0x104] sm:$0xf]
    %v117 = vld [vmem:[#allocation3 + $0x108] sm:$0xf]
    %v118 = vld [vmem:[#allocation3 + $0x10c] sm:$0xf]
    %v119 = vld [vmem:[#allocation3 + $0x110] sm:$0xf]
    %v120 = vld [vmem:[#allocation3 + $0x114] sm:$0xf]
    %v121 = vld [vmem:[#allocation3 + $0x118] sm:$0xf]
    %v122 = vld [vmem:[#allocation3 + $0x11c] sm:$0xf]
    %v123 = vld [vmem:[#allocation3 + $0x120] sm:$0xf]
    %v124 = vld [vmem:[#allocation3 + $0x124] sm:$0xf]
    %v125 = vld [vmem:[#allocation3 + $0x128] sm:$0xf]
    %v126 = vld [vmem:[#allocation3 + $0x12c] sm:$0xf]
    %v127 = vld [vmem:[#allocation3 + $0x130] sm:$0xf]
    %v128 = vld [vmem:[#allocation3 + $0x134] sm:$0xf]
    %v129 = vld [vmem:[#allocation3 + $0x138] sm:$0xf]
    %v130 = vld [vmem:[#allocation3 + $0x13c] sm:$0xf]
    %v131 = vld [vmem:[#allocation3 + $0x140] sm:$0xf]
    %v132 = vld [vmem:[#allocation3 + $0x144] sm:$0xf]
    %v133 = vld [vmem:[#allocation3 + $0x148] sm:$0xf]
    %v134 = vld [vmem:[#allocation3 + $0x14c] sm:$0xf]
    %v135 = vld [vmem:[#allocation3 + $0x150] sm:$0xf]
    %v136 = vld [vmem:[#allocation3 + $0x154] sm:$0xf]
    %v137 = vld [vmem:[#allocation3 + $0x158] sm:$0xf]
    %v138 = vld [vmem:[#allocation3 + $0x15c] sm:$0xf]
    %v139 = vld [vmem:[#allocation3 + $0x160] sm:$0xf]
    %v140 = vld [vmem:[#allocation3 + $0x164] sm:$0xf]
    %v141 = vld [vmem:[#allocation3 + $0x168] sm:$0xf]
    %v142 = vld [vmem:[#allocation3 + $0x16c] sm:$0xf]
    %v143 = vld [vmem:[#allocation3 + $0x170] sm:$0xf]
    %v144 = vld [vmem:[#allocation3 + $0x174] sm:$0xf]
    %v145 = vld [vmem:[#allocation3 + $0x178] sm:$0xf]
    %v146 = vld [vmem:[#allocation3 + $0x17c] sm:$0xf]
    %v147 = vld [vmem:[#allocation3 + $0x180] sm:$0xf]
    %v148 = vld [vmem:[#allocation3 + $0x184] sm:$0xf]
    %v149 = vld [vmem:[#allocation3 + $0x188] sm:$0xf]
    %v150 = vld [vmem:[#allocation3 + $0x18c] sm:$0xf]
    %v151 = vld [vmem:[#allocation3 + $0x190] sm:$0xf]
    %v152 = vld [vmem:[#allocation3 + $0x194] sm:$0xf]
    %v153 = vld [vmem:[#allocation3 + $0x198] sm:$0xf]
    %v154 = vld [vmem:[#allocation3 + $0x19c] sm:$0xf]
    %v155 = vld [vmem:[#allocation3 + $0x1a0] sm:$0xf]
    %v156 = vld [vmem:[#allocation3 + $0x1a4] sm:$0xf]
    %v157 = vld [vmem:[#allocation3 + $0x1a8] sm:$0xf]
    %v158 = vld [vmem:[#allocation3 + $0x1ac] sm:$0xf]
    %v159 = vld [vmem:[#allocation3 + $0x1b0] sm:$0xf]
    %v160 = vld [vmem:[#allocation3 + $0x1b4] sm:$0xf]
    %v161 = vld [vmem:[#allocation3 + $0x1b8] sm:$0xf]
    %v162 = vld [vmem:[#allocation3 + $0x1bc] sm:$0xf]
    %v163 = vld [vmem:[#allocation3 + $0x1c0] sm:$0xf]
    %v164 = vld [vmem:[#allocation3 + $0x1c4] sm:$0xf]
    %v165 = vld [vmem:[#allocation3 + $0x1c8] sm:$0xf]
    %v166 = vld [vmem:[#allocation3 + $0x1cc] sm:$0xf]
    %v167 = vld [vmem:[#allocation3 + $0x1d0] sm:$0xf]
    %v168 = vld [vmem:[#allocation3 + $0x1d4] sm:$0xf]
    %v169 = vld [vmem:[#allocation3 + $0x1d8] sm:$0xf]
    %v170 = vld [vmem:[#allocation3 + $0x1dc] sm:$0xf]
    %v171 = vld [vmem:[#allocation3 + $0x1e0] sm:$0xf]
    %v172 = vld [vmem:[#allocation3 + $0x1e4] sm:$0xf]
    %v173 = vld [vmem:[#allocation3 + $0x1e8] sm:$0xf]
    %v174 = vld [vmem:[#allocation3 + $0x1ec] sm:$0xf]
    %v175 = vld [vmem:[#allocation3 + $0x1f0] sm:$0xf]
    %v176 = vld [vmem:[#allocation3 + $0x1f4] sm:$0xf]
    %v177 = vld [vmem:[#allocation3 + $0x1f8] sm:$0xf]
    %v178 = vld [vmem:[#allocation3 + $0x1fc] sm:$0xf]
    %v187 = vunpack.c.l.b16 %v43
    %v188 = vunpack.c.h.b16 %v43
    %v189 = vunpack.c.l.b16 %v44
    %v190 = vunpack.c.h.b16 %v44
    %v191 = vunpack.c.l.b16 %v45
    %v192 = vunpack.c.h.b16 %v45
    %v193 = vunpack.c.l.b16 %v46
    %v194 = vunpack.c.h.b16 %v46
    %v195 = vunpack.c.l.b16 %v47
    %v196 = vunpack.c.h.b16 %v47
    %v197 = vunpack.c.l.b16 %v48
    %v198 = vunpack.c.h.b16 %v48
    %v199 = vunpack.c.l.b16 %v49
    %v200 = vunpack.c.h.b16 %v49
    %v201 = vunpack.c.l.b16 %v50
    %v202 = vunpack.c.h.b16 %v50
    %v203 = vpack.c.b16 %v195, %v187
    %v204 = vpack.c.b16 %v196, %v188
    %v205 = vpack.c.b16 %v197, %v189
    %v206 = vpack.c.b16 %v198, %v190
    %v207 = vpack.c.b16 %v199, %v191
    %v208 = vpack.c.b16 %v200, %v192
    %v209 = vpack.c.b16 %v201, %v193
    %v210 = vpack.c.b16 %v202, %v194
    %v347 = vunpack.c.l.b16 %v51
    %v348 = vunpack.c.l.b16 %v52
    %v349 = vunpack.c.l.b16 %v53
    %v350 = vunpack.c.l.b16 %v54
    %v351 = vunpack.c.l.b16 %v55
    %v352 = vunpack.c.l.b16 %v56
    %v353 = vunpack.c.l.b16 %v57
    %v354 = vunpack.c.l.b16 %v58
    %v355 = vunpack.c.l.b16 %v59
    %v356 = vunpack.c.l.b16 %v60
    %v357 = vunpack.c.l.b16 %v61
    %v358 = vunpack.c.l.b16 %v62
    %v359 = vunpack.c.l.b16 %v63
    %v360 = vunpack.c.l.b16 %v64
    %v361 = vunpack.c.l.b16 %v65
    %v362 = vunpack.c.l.b16 %v66
    %v363 = vunpack.c.l.b16 %v67
    %v364 = vunpack.c.l.b16 %v68
    %v365 = vunpack.c.l.b16 %v69
    %v366 = vunpack.c.l.b16 %v70
    %v367 = vunpack.c.l.b16 %v71
    %v368 = vunpack.c.l.b16 %v72
    %v369 = vunpack.c.l.b16 %v73
    %v370 = vunpack.c.l.b16 %v74
    %v371 = vunpack.c.l.b16 %v75
    %v372 = vunpack.c.l.b16 %v76
    %v373 = vunpack.c.l.b16 %v77
    %v374 = vunpack.c.l.b16 %v78
    %v375 = vunpack.c.l.b16 %v79
    %v376 = vunpack.c.l.b16 %v80
    %v377 = vunpack.c.l.b16 %v81
    %v378 = vunpack.c.l.b16 %v82
    %v379 = vunpack.c.l.b16 %v83
    %v380 = vunpack.c.l.b16 %v84
    %v381 = vunpack.c.l.b16 %v85
    %v382 = vunpack.c.l.b16 %v86
    %v383 = vunpack.c.l.b16 %v87
    %v384 = vunpack.c.l.b16 %v88
    %v385 = vunpack.c.l.b16 %v89
    %v386 = vunpack.c.l.b16 %v90
    %v387 = vunpack.c.l.b16 %v91
    %v388 = vunpack.c.l.b16 %v92
    %v389 = vunpack.c.l.b16 %v93
    %v390 = vunpack.c.l.b16 %v94
    %v391 = vunpack.c.l.b16 %v95
    %v392 = vunpack.c.l.b16 %v96
    %v393 = vunpack.c.l.b16 %v97
    %v394 = vunpack.c.l.b16 %v98
    %v395 = vunpack.c.l.b16 %v99
    %v396 = vunpack.c.l.b16 %v100
    %v397 = vunpack.c.l.b16 %v101
    %v398 = vunpack.c.l.b16 %v102
    %v399 = vunpack.c.l.b16 %v103
    %v400 = vunpack.c.l.b16 %v104
    %v401 = vunpack.c.l.b16 %v105
    %v402 = vunpack.c.l.b16 %v106
    %v403 = vunpack.c.l.b16 %v107
    %v404 = vunpack.c.l.b16 %v108
    %v405 = vunpack.c.l.b16 %v109
    %v406 = vunpack.c.l.b16 %v110
    %v407 = vunpack.c.l.b16 %v111
    %v408 = vunpack.c.l.b16 %v112
    %v409 = vunpack.c.l.b16 %v113
    %v410 = vunpack.c.l.b16 %v114
    %v411 = vunpack.c.l.b16 %v115
    %v412 = vunpack.c.l.b16 %v116
    %v413 = vunpack.c.l.b16 %v117
    %v414 = vunpack.c.l.b16 %v118
    %v415 = vunpack.c.l.b16 %v119
    %v416 = vunpack.c.l.b16 %v120
    %v417 = vunpack.c.l.b16 %v121
    %v418 = vunpack.c.l.b16 %v122
    %v419 = vunpack.c.l.b16 %v123
    %v420 = vunpack.c.l.b16 %v124
    %v421 = vunpack.c.l.b16 %v125
    %v422 = vunpack.c.l.b16 %v126
    %v423 = vunpack.c.l.b16 %v127
    %v424 = vunpack.c.l.b16 %v128
    %v425 = vunpack.c.l.b16 %v129
    %v426 = vunpack.c.l.b16 %v130
    %v427 = vunpack.c.l.b16 %v131
    %v428 = vunpack.c.l.b16 %v132
    %v429 = vunpack.c.l.b16 %v133
    %v430 = vunpack.c.l.b16 %v134
    %v431 = vunpack.c.l.b16 %v135
    %v432 = vunpack.c.l.b16 %v136
    %v433 = vunpack.c.l.b16 %v137
    %v434 = vunpack.c.l.b16 %v138
    %v435 = vunpack.c.l.b16 %v139
    %v436 = vunpack.c.l.b16 %v140
    %v437 = vunpack.c.l.b16 %v141
    %v438 = vunpack.c.l.b16 %v142
    %v439 = vunpack.c.l.b16 %v143
    %v440 = vunpack.c.l.b16 %v144
    %v441 = vunpack.c.l.b16 %v145
    %v442 = vunpack.c.l.b16 %v146
    %v443 = vunpack.c.l.b16 %v147
    %v444 = vunpack.c.l.b16 %v148
    %v445 = vunpack.c.l.b16 %v149
    %v446 = vunpack.c.l.b16 %v150
    %v447 = vunpack.c.l.b16 %v151
    %v448 = vunpack.c.l.b16 %v152
    %v449 = vunpack.c.l.b16 %v153
    %v450 = vunpack.c.l.b16 %v154
    %v451 = vunpack.c.l.b16 %v155
    %v452 = vunpack.c.l.b16 %v156
    %v453 = vunpack.c.l.b16 %v157
    %v454 = vunpack.c.l.b16 %v158
    %v455 = vunpack.c.l.b16 %v159
    %v456 = vunpack.c.l.b16 %v160
    %v457 = vunpack.c.l.b16 %v161
    %v458 = vunpack.c.l.b16 %v162
    %v459 = vunpack.c.l.b16 %v163
    %v460 = vunpack.c.l.b16 %v164
    %v461 = vunpack.c.l.b16 %v165
    %v462 = vunpack.c.l.b16 %v166
    %v463 = vunpack.c.l.b16 %v167
    %v464 = vunpack.c.l.b16 %v168
    %v465 = vunpack.c.l.b16 %v169
    %v466 = vunpack.c.l.b16 %v170
    %v467 = vunpack.c.l.b16 %v171
    %v468 = vunpack.c.l.b16 %v172
    %v469 = vunpack.c.l.b16 %v173
    %v470 = vunpack.c.l.b16 %v174
    %v471 = vunpack.c.l.b16 %v175
    %v472 = vunpack.c.l.b16 %v176
    %v473 = vunpack.c.l.b16 %v177
    %v474 = vunpack.c.l.b16 %v178
    %v475 = vpack.c.b16 %v348, %v347
    %v476 = vpack.c.b16 %v350, %v349
    %v477 = vpack.c.b16 %v352, %v351
    %v478 = vpack.c.b16 %v354, %v353
    %v479 = vpack.c.b16 %v356, %v355
    %v480 = vpack.c.b16 %v358, %v357
    %v481 = vpack.c.b16 %v360, %v359
    %v482 = vpack.c.b16 %v362, %v361
    %v483 = vpack.c.b16 %v364, %v363
    %v484 = vpack.c.b16 %v366, %v365
    %v485 = vpack.c.b16 %v368, %v367
    %v486 = vpack.c.b16 %v370, %v369
    %v487 = vpack.c.b16 %v372, %v371
    %v488 = vpack.c.b16 %v374, %v373
    %v489 = vpack.c.b16 %v376, %v375
    %v490 = vpack.c.b16 %v378, %v377
    %v491 = vpack.c.b16 %v380, %v379
    %v492 = vpack.c.b16 %v382, %v381
    %v493 = vpack.c.b16 %v384, %v383
    %v494 = vpack.c.b16 %v386, %v385
    %v495 = vpack.c.b16 %v388, %v387
    %v496 = vpack.c.b16 %v390, %v389
    %v497 = vpack.c.b16 %v392, %v391
    %v498 = vpack.c.b16 %v394, %v393
    %v499 = vpack.c.b16 %v396, %v395
    %v500 = vpack.c.b16 %v398, %v397
    %v501 = vpack.c.b16 %v400, %v399
    %v502 = vpack.c.b16 %v402, %v401
    %v503 = vpack.c.b16 %v404, %v403
    %v504 = vpack.c.b16 %v406, %v405
    %v505 = vpack.c.b16 %v408, %v407
    %v506 = vpack.c.b16 %v410, %v409
    %v507 = vpack.c.b16 %v412, %v411
    %v508 = vpack.c.b16 %v414, %v413
    %v509 = vpack.c.b16 %v416, %v415
    %v510 = vpack.c.b16 %v418, %v417
    %v511 = vpack.c.b16 %v420, %v419
    %v512 = vpack.c.b16 %v422, %v421
    %v513 = vpack.c.b16 %v424, %v423
    %v514 = vpack.c.b16 %v426, %v425
    %v515 = vpack.c.b16 %v428, %v427
    %v516 = vpack.c.b16 %v430, %v429
    %v517 = vpack.c.b16 %v432, %v431
    %v518 = vpack.c.b16 %v434, %v433
    %v519 = vpack.c.b16 %v436, %v435
    %v520 = vpack.c.b16 %v438, %v437
    %v521 = vpack.c.b16 %v440, %v439
    %v522 = vpack.c.b16 %v442, %v441
    %v523 = vpack.c.b16 %v444, %v443
    %v524 = vpack.c.b16 %v446, %v445
    %v525 = vpack.c.b16 %v448, %v447
    %v526 = vpack.c.b16 %v450, %v449
    %v527 = vpack.c.b16 %v452, %v451
    %v528 = vpack.c.b16 %v454, %v453
    %v529 = vpack.c.b16 %v456, %v455
    %v530 = vpack.c.b16 %v458, %v457
    %v531 = vpack.c.b16 %v460, %v459
    %v532 = vpack.c.b16 %v462, %v461
    %v533 = vpack.c.b16 %v464, %v463
    %v534 = vpack.c.b16 %v466, %v465
    %v535 = vpack.c.b16 %v468, %v467
    %v536 = vpack.c.b16 %v470, %v469
    %v537 = vpack.c.b16 %v472, %v471
    %v538 = vpack.c.b16 %v474, %v473
    %603 = vmatprep.subr.bf16.mxu0 0
    %604 = vmatpush1.bf16.msra.mxu0 %v482
    %605 = vmatprep.subr.bf16.mxu0 0
    %606 = vmatpush1.bf16.msra.mxu0 %v481
    %607 = vmatprep.subr.bf16.mxu0 0
    %608 = vmatpush1.bf16.msra.mxu0 %v480
    %609 = vmatprep.subr.bf16.mxu0 0
    %610 = vmatpush1.bf16.msra.mxu0 %v479
    %611 = vmatprep.subr.bf16.mxu0 0
    %612 = vmatpush1.bf16.msra.mxu0 %v478
    %613 = vmatprep.subr.bf16.mxu0 0
    %614 = vmatpush1.bf16.msra.mxu0 %v477
    %615 = vmatprep.subr.bf16.mxu0 0
    %616 = vmatpush1.bf16.msra.mxu0 %v476
    %617 = vmatprep.subr.bf16.mxu0 0
    %618 = vmatpush1.bf16.msra.mxu0 %v475
    %619 = vmatprep.subr.bf16.mxu0 0
    %620 = vmatpush2.bf16.msra.mxu0 %v490
    %621 = vmatprep.subr.bf16.mxu0 0
    %622 = vmatpush2.bf16.msra.mxu0 %v489
    %623 = vmatprep.subr.bf16.mxu0 0
    %624 = vmatpush2.bf16.msra.mxu0 %v488
    %625 = vmatprep.subr.bf16.mxu0 0
    %626 = vmatpush2.bf16.msra.mxu0 %v487
    %627 = vmatprep.subr.bf16.mxu0 0
    %628 = vmatpush2.bf16.msra.mxu0 %v486
    %629 = vmatprep.subr.bf16.mxu0 0
    %630 = vmatpush2.bf16.msra.mxu0 %v485
    %631 = vmatprep.subr.bf16.mxu0 0
    %632 = vmatpush2.bf16.msra.mxu0 %v484
    %633 = vmatprep.subr.bf16.mxu0 0
    %634 = vmatpush2.bf16.msra.mxu0 %v483
    %635 = vmatprep.mubr.bf16.mxu0 %v204
    %636 = vmatmul.mubr.bf16.gmra.mxu0 %v203
    %v637 = vpop.f32.mrf.mxu0
    %v638 = vadd.f32 0.0, %v637
    %v639 = vpop.f32.mrf.mxu0
    %v640 = vpop.f32.mrf.mxu0
    %v641 = vadd.f32 0.0, %v640
    %v642 = vpop.f32.mrf.mxu0
    %643 = vdwg.mxu0
    %644 = vmatprep.subr.bf16.mxu0 0
    %645 = vmatpush1.bf16.msra.mxu0 %v498
    %646 = vmatprep.subr.bf16.mxu0 0
    %647 = vmatpush1.bf16.msra.mxu0 %v497
    %648 = vmatprep.subr.bf16.mxu0 0
    %649 = vmatpush1.bf16.msra.mxu0 %v496
    %650 = vmatprep.subr.bf16.mxu0 0
    %651 = vmatpush1.bf16.msra.mxu0 %v495
    %652 = vmatprep.subr.bf16.mxu0 0
    %653 = vmatpush1.bf16.msra.mxu0 %v494
    %654 = vmatprep.subr.bf16.mxu0 0
    %655 = vmatpush1.bf16.msra.mxu0 %v493
    %656 = vmatprep.subr.bf16.mxu0 0
    %657 = vmatpush1.bf16.msra.mxu0 %v492
    %658 = vmatprep.subr.bf16.mxu0 0
    %659 = vmatpush1.bf16.msra.mxu0 %v491
    %660 = vmatprep.subr.bf16.mxu0 0
    %661 = vmatpush2.bf16.msra.mxu0 %v506
    %662 = vmatprep.subr.bf16.mxu0 0
    %663 = vmatpush2.bf16.msra.mxu0 %v505
    %664 = vmatprep.subr.bf16.mxu0 0
    %665 = vmatpush2.bf16.msra.mxu0 %v504
    %666 = vmatprep.subr.bf16.mxu0 0
    %667 = vmatpush2.bf16.msra.mxu0 %v503
    %668 = vmatprep.subr.bf16.mxu0 0
    %669 = vmatpush2.bf16.msra.mxu0 %v502
    %670 = vmatprep.subr.bf16.mxu0 0
    %671 = vmatpush2.bf16.msra.mxu0 %v501
    %672 = vmatprep.subr.bf16.mxu0 0
    %673 = vmatpush2.bf16.msra.mxu0 %v500
    %674 = vmatprep.subr.bf16.mxu0 0
    %675 = vmatpush2.bf16.msra.mxu0 %v499
    %676 = vmatprep.mubr.bf16.mxu0 %v206
    %677 = vmatmul.mubr.bf16.gmra.mxu0 %v205
    %v678 = vpop.f32.mrf.mxu0
    %v679 = vadd.f32 %v638, %v678
    %v680 = vpop.f32.mrf.mxu0
    %v681 = vpop.f32.mrf.mxu0
    %v682 = vadd.f32 %v641, %v681
    %v683 = vpop.f32.mrf.mxu0
    %684 = vdwg.mxu0
    %685 = vmatprep.subr.bf16.mxu0 0
    %686 = vmatpush1.bf16.msra.mxu0 %v514
    %687 = vmatprep.subr.bf16.mxu0 0
    %688 = vmatpush1.bf16.msra.mxu0 %v513
    %689 = vmatprep.subr.bf16.mxu0 0
    %690 = vmatpush1.bf16.msra.mxu0 %v512
    %691 = vmatprep.subr.bf16.mxu0 0
    %692 = vmatpush1.bf16.msra.mxu0 %v511
    %693 = vmatprep.subr.bf16.mxu0 0
    %694 = vmatpush1.bf16.msra.mxu0 %v510
    %695 = vmatprep.subr.bf16.mxu0 0
    %696 = vmatpush1.bf16.msra.mxu0 %v509
    %697 = vmatprep.subr.bf16.mxu0 0
    %698 = vmatpush1.bf16.msra.mxu0 %v508
    %699 = vmatprep.subr.bf16.mxu0 0
    %700 = vmatpush1.bf16.msra.mxu0 %v507
    %701 = vmatprep.subr.bf16.mxu0 0
    %702 = vmatpush2.bf16.msra.mxu0 %v522
    %703 = vmatprep.subr.bf16.mxu0 0
    %704 = vmatpush2.bf16.msra.mxu0 %v521
    %705 = vmatprep.subr.bf16.mxu0 0
    %706 = vmatpush2.bf16.msra.mxu0 %v520
    %707 = vmatprep.subr.bf16.mxu0 0
    %708 = vmatpush2.bf16.msra.mxu0 %v519
    %709 = vmatprep.subr.bf16.mxu0 0
    %710 = vmatpush2.bf16.msra.mxu0 %v518
    %711 = vmatprep.subr.bf16.mxu0 0
    %712 = vmatpush2.bf16.msra.mxu0 %v517
    %713 = vmatprep.subr.bf16.mxu0 0
    %714 = vmatpush2.bf16.msra.mxu0 %v516
    %715 = vmatprep.subr.bf16.mxu0 0
    %716 = vmatpush2.bf16.msra.mxu0 %v515
    %717 = vmatprep.mubr.bf16.mxu0 %v208
    %718 = vmatmul.mubr.bf16.gmra.mxu0 %v207
    %v719 = vpop.f32.mrf.mxu0
    %v720 = vadd.f32 %v679, %v719
    %v721 = vpop.f32.mrf.mxu0
    %v722 = vpop.f32.mrf.mxu0
    %v723 = vadd.f32 %v682, %v722
    %v724 = vpop.f32.mrf.mxu0
    %725 = vdwg.mxu0
    %726 = vmatprep.subr.bf16.mxu0 0
    %727 = vmatpush1.bf16.msra.mxu0 %v530
    %728 = vmatprep.subr.bf16.mxu0 0
    %729 = vmatpush1.bf16.msra.mxu0 %v529
    %730 = vmatprep.subr.bf16.mxu0 0
    %731 = vmatpush1.bf16.msra.mxu0 %v528
    %732 = vmatprep.subr.bf16.mxu0 0
    %733 = vmatpush1.bf16.msra.mxu0 %v527
    %734 = vmatprep.subr.bf16.mxu0 0
    %735 = vmatpush1.bf16.msra.mxu0 %v526
    %736 = vmatprep.subr.bf16.mxu0 0
    %737 = vmatpush1.bf16.msra.mxu0 %v525
    %738 = vmatprep.subr.bf16.mxu0 0
    %739 = vmatpush1.bf16.msra.mxu0 %v524
    %740 = vmatprep.subr.bf16.mxu0 0
    %741 = vmatpush1.bf16.msra.mxu0 %v523
    %742 = vmatprep.subr.bf16.mxu0 0
    %743 = vmatpush2.bf16.msra.mxu0 %v538
    %744 = vmatprep.subr.bf16.mxu0 0
    %745 = vmatpush2.bf16.msra.mxu0 %v537
    %746 = vmatprep.subr.bf16.mxu0 0
    %747 = vmatpush2.bf16.msra.mxu0 %v536
    %748 = vmatprep.subr.bf16.mxu0 0
    %749 = vmatpush2.bf16.msra.mxu0 %v535
    %750 = vmatprep.subr.bf16.mxu0 0
    %751 = vmatpush2.bf16.msra.mxu0 %v534
    %752 = vmatprep.subr.bf16.mxu0 0
    %753 = vmatpush2.bf16.msra.mxu0 %v533
    %754 = vmatprep.subr.bf16.mxu0 0
    %755 = vmatpush2.bf16.msra.mxu0 %v532
    %756 = vmatprep.subr.bf16.mxu0 0
    %757 = vmatpush2.bf16.msra.mxu0 %v531
    %758 = vmatprep.mubr.bf16.mxu0 %v210
    %759 = vmatmul.mubr.bf16.gmra.mxu0 %v209
    %v760 = vpop.f32.mrf.mxu0
    %v761 = vadd.f32 %v720, %v760
    %v762 = vpop.f32.mrf.mxu0
    %v763 = vpop.f32.mrf.mxu0
    %v764 = vadd.f32 %v723, %v763
    %v765 = vpop.f32.mrf.mxu0
    %766 = vdwg.mxu0
    %v767 = vadd.f32 %v41, %v761
    %v768 = vadd.f32 %v42, %v764
    %769 = vst [vmem:[#allocation2] sm:$0xff] %v767
    %770 = vst [vmem:[#allocation2 + $0x8] sm:$0xff] %v768
    // Predicated region
    $region30: #{fmri_net_forward.1} parent=1 // pred_check
      %p771 = pneg %p35
    $region31: #{fmri_net_forward.1} parent=1 // pred_check_branch
      %773 = sbr.rel (%p771) target = $region33
    $region32: #{fmri_net_forward.1} parent=1 // pred_region
      %v774 = vld [vmem:[#allocation2] sm:$0xff]
      %v775 = vld [vmem:[#allocation2 + $0x8] sm:$0xff]
      %v776 = vld [vmem:[%s2] sm:$0x1]
      %v778 = vlaneseq
      %v779 = vshrl.u32 %v778, 7
      %v780 = vsub.s32 0, %v779
      %v781 = vrot.slane %v776, %v780
      %v783 = vadd.f32 %v774, %v781
      %v784 = vadd.f32 %v775, %v781
      %v785 = vmax.f32 %v783, 0.0
      %v786 = vmax.f32 %v784, 0.0
      %v787 = vld [vmem:[%s3] sm:$0xff]
      %v788 = vld [vmem:[%s3 + $0x8] sm:$0xff]
      %v789 = vld [vmem:[%s3 + $0x10] sm:$0xff]
      %v790 = vld [vmem:[%s3 + $0x18] sm:$0xff]
      %v791 = vld [vmem:[%s3 + $0x20] sm:$0xff]
      %v792 = vld [vmem:[%s3 + $0x28] sm:$0xff]
      %v793 = vld [vmem:[%s3 + $0x30] sm:$0xff]
      %v794 = vld [vmem:[%s3 + $0x38] sm:$0xff]
      %v795 = vld [vmem:[%s3 + $0x40] sm:$0xff]
      %v796 = vld [vmem:[%s3 + $0x48] sm:$0xff]
      %v797 = vld [vmem:[%s3 + $0x50] sm:$0xff]
      %v798 = vld [vmem:[%s3 + $0x58] sm:$0xff]
      %v799 = vld [vmem:[%s3 + $0x60] sm:$0xff]
      %v800 = vld [vmem:[%s3 + $0x68] sm:$0xff]
      %v801 = vld [vmem:[%s3 + $0x70] sm:$0xff]
      %v802 = vld [vmem:[%s3 + $0x78] sm:$0xff]
      %v803 = vld [vmem:[%s4] sm:$0x1]
      %v805 = vlaneseq
      %v806 = vshrl.u32 %v805, 7
      %v807 = vsub.s32 0, %v806
      %v808 = vrot.slane %v803, %v807
      %810 = vmatprep.subr.mxu0 0.0
      %811 = vmatpush1.msra.mxu0 %v802
      %812 = vmatprep.subr.mxu0 0.0
      %813 = vmatpush1.msra.mxu0 %v801
      %814 = vmatprep.subr.mxu0 0.0
      %815 = vmatpush1.msra.mxu0 %v800
      %816 = vmatprep.subr.mxu0 0.0
      %817 = vmatpush1.msra.mxu0 %v799
      %818 = vmatprep.subr.mxu0 0.0
      %819 = vmatpush1.msra.mxu0 %v798
      %820 = vmatprep.subr.mxu0 0.0
      %821 = vmatpush1.msra.mxu0 %v797
      %822 = vmatprep.subr.mxu0 0.0
      %823 = vmatpush1.msra.mxu0 %v796
      %824 = vmatprep.subr.mxu0 0.0
      %825 = vmatpush1.msra.mxu0 %v795
      %826 = vmatprep.subr.mxu0 0.0
      %827 = vmatpush1.msra.mxu0 %v794
      %828 = vmatprep.subr.mxu0 0.0
      %829 = vmatpush1.msra.mxu0 %v793
      %830 = vmatprep.subr.mxu0 0.0
      %831 = vmatpush1.msra.mxu0 %v792
      %832 = vmatprep.subr.mxu0 0.0
      %833 = vmatpush1.msra.mxu0 %v791
      %834 = vmatprep.subr.mxu0 0.0
      %835 = vmatpush1.msra.mxu0 %v790
      %836 = vmatprep.subr.mxu0 0.0
      %837 = vmatpush1.msra.mxu0 %v789
      %838 = vmatprep.subr.mxu0 0.0
      %839 = vmatpush1.msra.mxu0 %v788
      %840 = vmatprep.subr.mxu0 0.0
      %841 = vmatpush1.msra.mxu0 %v787
      %842 = vmatprep.subr.mxu0 0.0
      %843 = vmatpush2.msra.mxu0 0.0
      %844 = vmatprep.subr.mxu0 0.0
      %845 = vmatpush2.msra.mxu0 0.0
      %846 = vmatprep.subr.mxu0 0.0
      %847 = vmatpush2.msra.mxu0 0.0
      %848 = vmatprep.subr.mxu0 0.0
      %849 = vmatpush2.msra.mxu0 0.0
      %850 = vmatprep.subr.mxu0 0.0
      %851 = vmatpush2.msra.mxu0 0.0
      %852 = vmatprep.subr.mxu0 0.0
      %853 = vmatpush2.msra.mxu0 0.0
      %854 = vmatprep.subr.mxu0 0.0
      %855 = vmatpush2.msra.mxu0 0.0
      %856 = vmatprep.subr.mxu0 0.0
      %857 = vmatpush2.msra.mxu0 0.0
      %858 = vmatprep.subr.mxu0 0.0
      %859 = vmatpush2.msra.mxu0 0.0
      %860 = vmatprep.subr.mxu0 0.0
      %861 = vmatpush2.msra.mxu0 0.0
      %862 = vmatprep.subr.mxu0 0.0
      %863 = vmatpush2.msra.mxu0 0.0
      %864 = vmatprep.subr.mxu0 0.0
      %865 = vmatpush2.msra.mxu0 0.0
      %866 = vmatprep.subr.mxu0 0.0
      %867 = vmatpush2.msra.mxu0 0.0
      %868 = vmatprep.subr.mxu0 0.0
      %869 = vmatpush2.msra.mxu0 0.0
      %870 = vmatprep.subr.mxu0 0.0
      %871 = vmatpush2.msra.mxu0 0.0
      %872 = vmatprep.subr.mxu0 0.0
      %873 = vmatpush2.msra.mxu0 0.0
      %874 = vmatprep.mubr.f32.mxu0 0.0
      %875 = vmatmul.mubr.f32.gmra.mxu0 %v785
      %v876 = vpop.f32.mrf.mxu0
      %v877 = vadd.f32 %v808, %v876
      %v878 = vpop.f32.mrf.mxu0
      %879 = vmatprep.mubr.f32.mxu0 0.0
      %880 = vmatmul.mubr.f32.gmra.mxu0 %v786
      %v881 = vpop.f32.mrf.mxu0
      %v882 = vadd.f32 %v808, %v881
      %v883 = vpop.f32.mrf.mxu0
      %884 = vdwg.mxu0
      %vm885 = vcmask 15360
      %886 = vst.msk [vmem:[%s5] sm:$0xff] %vm885, %v877
      %887 = vst.msk [vmem:[%s5 + $0x8] sm:$0xff] %vm885, %v882
    $region33: #{fmri_net_forward.1} parent=1 // pred_fallthru
      _
    // Predicated region
    $region34: #{fmri_net_forward.1} parent=1 // pred_check
      _
    $region35: #{fmri_net_forward.1} parent=1 // pred_check_branch
      %889 = sbr.rel (0) target = $region37
    $region36: #{fmri_net_forward.1} parent=1 // pred_region
      _
    $region37: #{fmri_net_forward.1} parent=1 // pred_fallthru
      _
    // Predicated region
    $region38: #{fmri_net_forward.1} parent=1 // pred_check
      _
    $region39: #{fmri_net_forward.1} parent=1 // pred_check_branch
      %891 = sbr.rel (0) target = $region41
    $region40: #{fmri_net_forward.1} parent=1 // pred_region
      _
    $region41: #{fmri_net_forward.1} parent=1 // pred_fallthru
      _
    %892 = vsyncpa [#allocation4], 1

</llo_original>
